<compile_context>
chip_gen: v7x
topology: tpu7x:2x2x1
jax: 0.10.0
libtpu: 0.0.40
codegen_flags: <defaults>
</compile_context>

<pallas_src>
import jax
import jax.numpy as jnp
import numpy as np
from jax.experimental import pallas as pl
from jax.experimental.pallas import tpu as pltpu

ROWS, COLS = 6, 7
NUM_ACTIONS = COLS            # utils.default_config['columns'] == 7
IN_CH = 3                     # one-hot planes: empty / own / opponent
CONV_CH = 32
HIDDEN = 64
KH = KW = 3
P = ROWS * COLS               # 42 board positions
K_RAW = KH * KW * IN_CH       # 27 im2col features
K_PAD = 32                    # 27 weights + 1 bias column, zero-padded to 32
ACT_PAD = 128                 # lane-dense padded action dimension
TB = 8                        # batch tile per grid step (TB*P = 336 rows, /8 ok)
NEG_INF = -1e30               # bias for padded action columns


def _actor_kernel(patches_ref, pool_ref, w1_ref, w2_ref, b2_ref,
                  w3_ref, b3_ref, out_ref):
    """One batch tile: conv-as-matmul -> ReLU -> mean pool -> MLP -> softmax."""
    # 3x3 'same' conv as im2col matmul (bias folded into w1 via ones column).
    h1 = jnp.dot(patches_ref[...], w1_ref[...],
                 preferred_element_type=jnp.float32)           # (TB*P, CONV_CH)
    h1 = jnp.maximum(h1, 0.0)

    # Spatial mean pool via a small resident (TB, TB*P) averaging matrix.
    pooled = jnp.dot(pool_ref[...], h1,
                     preferred_element_type=jnp.float32)        # (TB, CONV_CH)

    h2 = jnp.dot(pooled.astype(jnp.bfloat16), w2_ref[...],
                 preferred_element_type=jnp.float32) + b2_ref[...]
    h2 = jnp.maximum(h2, 0.0)                                   # (TB, HIDDEN)

    logits = jnp.dot(h2.astype(jnp.bfloat16), w3_ref[...],
                     preferred_element_type=jnp.float32) + b3_ref[...]  # (TB,128)
    # Padded action columns carry a -1e30 bias -> exp underflows to 0 exactly,
    # so softmax over the padded 128 lanes equals softmax over the real 7.

    m = jnp.max(logits, axis=1, keepdims=True)
    e = jnp.exp(logits - m)
    denom = jnp.sum(e, axis=1, keepdims=True)
    # CombinedModel's all_probs = ones(...) * probs is a no-op for one actor.
    out_ref[...] = e * pl.reciprocal(denom, approx=True)


def init_actor_params(key):
    k1, k2, k3 = jax.random.split(key, 3)
    w1 = jax.random.normal(k1, (K_RAW, CONV_CH), jnp.float32) / np.sqrt(K_RAW)
    b1 = jnp.zeros((CONV_CH,), jnp.float32)
    w2 = jax.random.normal(k2, (CONV_CH, HIDDEN), jnp.float32) / np.sqrt(CONV_CH)
    b2 = jnp.zeros((HIDDEN,), jnp.float32)
    w3 = jax.random.normal(k3, (HIDDEN, NUM_ACTIONS), jnp.float32) / np.sqrt(HIDDEN)
    b3 = jnp.zeros((NUM_ACTIONS,), jnp.float32)
    return (w1, b1, w2, b2, w3, b3)


def _pack_params(params):
    """Fold b1 into w1, pad actions to 128, cast MXU operands to bf16."""
    w1, b1, w2, b2, w3, b3 = params
    w1_aug = jnp.zeros((K_PAD, CONV_CH), jnp.float32)
    w1_aug = w1_aug.at[:K_RAW].set(w1).at[K_RAW].set(b1)        # bias row
    w3_pad = jnp.zeros((HIDDEN, ACT_PAD), jnp.float32).at[:, :NUM_ACTIONS].set(w3)
    b3_pad = jnp.full((1, ACT_PAD), NEG_INF, jnp.float32).at[0, :NUM_ACTIONS].set(b3)
    return (w1_aug.astype(jnp.bfloat16),
            w2.astype(jnp.bfloat16),
            b2.reshape(1, HIDDEN).astype(jnp.float32),
            w3_pad.astype(jnp.bfloat16),
            b3_pad)


def _create_state(player_id, boards):
    """actor.create_state glue: (B, 42) int board -> (B, 6, 7, 3) one-hot NHWC."""
    b = boards.reshape(-1, ROWS, COLS)
    empty = (b == 0).astype(jnp.float32)
    own = (b == player_id).astype(jnp.float32)
    opp = (b == (3 - player_id)).astype(jnp.float32)
    return jnp.stack([empty, own, opp], axis=-1)


def _im2col(x):
    """(B, 6, 7, Cin) -> (B*42, K_PAD) patches (pad=1 3x3) with a ones bias col."""
    batch = x.shape[0]
    xp = jnp.pad(x, ((0, 0), (1, 1), (1, 1), (0, 0)))
    cols = []
    for kh in range(KH):
        for kw in range(KW):
            cols.append(xp[:, kh:kh + ROWS, kw:kw + COLS, :])
    patches = jnp.concatenate(cols, axis=-1).reshape(batch * P, K_RAW)
    ones = jnp.ones((batch * P, 1), jnp.float32)               # folds conv bias
    zeros = jnp.zeros((batch * P, K_PAD - K_RAW - 1), jnp.float32)
    return jnp.concatenate([patches, ones, zeros], axis=-1)    # (B*P, 32)


def combined_model_forward(params, player_id, boards):
    batch = boards.shape[0]
    nb = (batch + TB - 1) // TB
    b_pad = nb * TB

    # Glue: pad batch, one-hot encode, im2col (with bias column), cast to bf16.
    boards_p = jnp.pad(boards, ((0, b_pad - batch), (0, 0)))
    state = _create_state(player_id, boards_p)
    patches = _im2col(state).astype(jnp.bfloat16)              # (b_pad*P, 32)

    # Constant per-tile mean-pool matrix (TB, TB*P) -- resident across the grid.
    pool = jnp.kron(jnp.eye(TB, dtype=jnp.float32),
                    jnp.full((1, P), 1.0 / P, jnp.float32))

    w1, w2, b2, w3, b3 = _pack_params(params)

    resident = lambda i: (0, 0)
    grid_spec = pltpu.PrefetchScalarGridSpec(
        num_scalar_prefetch=0,
        grid=(nb,),
        in_specs=[
            pl.BlockSpec((TB * P, K_PAD), lambda i: (i, 0)),   # patches (tiled)
            pl.BlockSpec((TB, TB * P), resident),              # pool
            pl.BlockSpec((K_PAD, CONV_CH), resident),          # w1 (+bias row)
            pl.BlockSpec((CONV_CH, HIDDEN), resident),         # w2
            pl.BlockSpec((1, HIDDEN), resident),               # b2
            pl.BlockSpec((HIDDEN, ACT_PAD), resident),         # w3 (padded)
            pl.BlockSpec((1, ACT_PAD), resident),              # b3 (padded)
        ],
        out_specs=pl.BlockSpec((TB, ACT_PAD), lambda i: (i, 0)),
    )

    out = pl.pallas_call(
        _actor_kernel,
        out_shape=jax.ShapeDtypeStruct((b_pad, ACT_PAD), jnp.float32),
        grid_spec=grid_spec,
        compiler_params=pltpu.CompilerParams(
            dimension_semantics=("parallel",),          # megacore-shard batch
            vmem_limit_bytes=32 * 1024 * 1024),         # safe on v7x's 64 MiB
    )(patches, pool, w1, w2, b2, w3, b3)

    # NOTE: at tiny batch (B=2) this is launch-overhead bound; for real serving,
    # batch many boards (and all CombinedModel actors) through one call.
    return out[:batch, :NUM_ACTIONS]


def _reference_forward(params, player_id, boards):
    """Pure-JAX reference mirroring the kernel math (for correctness check)."""
    w1, w2, b2, w3, b3 = _pack_params(params)
    state = _create_state(player_id, boards)
    patches = _im2col(state).astype(jnp.bfloat16)
    h1 = jnp.maximum(
        jnp.dot(patches, w1, preferred_element_type=jnp.float32), 0.0)
    pooled = jnp.mean(h1.reshape(boards.shape[0], P, CONV_CH), axis=1)
    h2 = jnp.maximum(
        jnp.dot(pooled.astype(jnp.bfloat16), w2,
                preferred_element_type=jnp.float32) + b2, 0.0)
    logits = jnp.dot(h2.astype(jnp.bfloat16), w3,
                     preferred_element_type=jnp.float32) + b3
    return jax.nn.softmax(logits, axis=1)[:, :NUM_ACTIONS]


if __name__ == "__main__":
    key = jax.random.PRNGKey(0)
    pkey, bkey = jax.random.split(key)

    params = init_actor_params(pkey)

    batch = 2
    player_id = 1
    # game_state: batch of 6x7 boards with cells in {0 empty, 1, 2}
    boards = jax.random.randint(bkey, (batch, ROWS * COLS), 0, 3, dtype=jnp.int32)

    probs = combined_model_forward(params, player_id, boards)
    probs = jax.block_until_ready(probs)

    assert probs.shape == (batch, NUM_ACTIONS)
    # rows sum to ~1 (approx-reciprocal softmax -> loose tolerance)
    np.testing.assert_allclose(np.asarray(jnp.sum(probs, axis=1)),
                               np.ones((batch,), np.float32), rtol=0, atol=1e-2)
    ref = np.asarray(_reference_forward(params, player_id, boards))
    np.testing.assert_allclose(np.asarray(probs), ref, rtol=0, atol=1e-2)
    print("KERNEL_OK")
</pallas_src>

<mosaic_0001>
module attributes {stable_mosaic.version = 11 : i64} {
  func.func @_actor_kernel(%arg0: i32, %arg1: memref<336x32xbf16, #tpu.memory_space<vmem>>, %arg2: memref<8x336xf32, #tpu.memory_space<vmem>>, %arg3: memref<32x32xbf16, #tpu.memory_space<vmem>>, %arg4: memref<32x64xbf16, #tpu.memory_space<vmem>>, %arg5: memref<1x64xf32, #tpu.memory_space<vmem>>, %arg6: memref<64x128xbf16, #tpu.memory_space<vmem>>, %arg7: memref<1x128xf32, #tpu.memory_space<vmem>>, %arg8: memref<8x128xf32, #tpu.memory_space<vmem>>) attributes {dimension_semantics = [#tpu.dimension_semantics<parallel>], iteration_bounds = array<i64: 1>, scalar_prefetch = 0 : i64, scratch_operands = 0 : i64, tpu.core_type = #tpu.core_type<tc>, window_params = [{transform_indices = @transform_0, window_bounds = array<i64: 336, 32>}, {pipeline_mode = #tpu.pipeline_mode<synchronous>, transform_indices = @transform_1, window_bounds = array<i64: 8, 336>}, {pipeline_mode = #tpu.pipeline_mode<synchronous>, transform_indices = @transform_2, window_bounds = array<i64: 32, 32>}, {pipeline_mode = #tpu.pipeline_mode<synchronous>, transform_indices = @transform_3, window_bounds = array<i64: 32, 64>}, {pipeline_mode = #tpu.pipeline_mode<synchronous>, transform_indices = @transform_4, window_bounds = array<i64: 1, 64>}, {pipeline_mode = #tpu.pipeline_mode<synchronous>, transform_indices = @transform_5, window_bounds = array<i64: 64, 128>}, {pipeline_mode = #tpu.pipeline_mode<synchronous>, transform_indices = @transform_6, window_bounds = array<i64: 1, 128>}, {transform_indices = @transform_7, window_bounds = array<i64: 8, 128>}]} {
    %c0 = arith.constant 0 : index
    %c0_0 = arith.constant 0 : index
    %0 = vector.load %arg1[%c0, %c0_0] : memref<336x32xbf16, #tpu.memory_space<vmem>>, vector<336x32xbf16>
    %c0_1 = arith.constant 0 : index
    %c0_2 = arith.constant 0 : index
    %1 = vector.load %arg3[%c0_1, %c0_2] : memref<32x32xbf16, #tpu.memory_space<vmem>>, vector<32x32xbf16>
    %cst = arith.constant dense<0.000000e+00> : vector<336x32xf32>
    %2 = tpu.matmul %0, %1, %cst {dimension_numbers = #tpu.dot_dimension_numbers<[1], [0], [0], [1], [0, 0, 1, 1], [], []>} : vector<336x32xbf16>, vector<32x32xbf16>, vector<336x32xf32> -> vector<336x32xf32>
    %cst_3 = arith.constant 0.000000e+00 : f32
    %3 = vector.broadcast %cst_3 : f32 to vector<336x32xf32>
    %4 = arith.maximumf %2, %3 : vector<336x32xf32>
    %c0_4 = arith.constant 0 : index
    %c0_5 = arith.constant 0 : index
    %5 = vector.load %arg2[%c0_4, %c0_5] : memref<8x336xf32, #tpu.memory_space<vmem>>, vector<8x336xf32>
    %cst_6 = arith.constant dense<0.000000e+00> : vector<8x32xf32>
    %6 = tpu.matmul %5, %4, %cst_6 {dimension_numbers = #tpu.dot_dimension_numbers<[1], [0], [0], [1], [0, 0, 1, 1], [], []>} : vector<8x336xf32>, vector<336x32xf32>, vector<8x32xf32> -> vector<8x32xf32>
    %7 = arith.truncf %6 : vector<8x32xf32> to vector<8x32xbf16>
    %c0_7 = arith.constant 0 : index
    %c0_8 = arith.constant 0 : index
    %8 = vector.load %arg4[%c0_7, %c0_8] : memref<32x64xbf16, #tpu.memory_space<vmem>>, vector<32x64xbf16>
    %cst_9 = arith.constant dense<0.000000e+00> : vector<8x64xf32>
    %9 = tpu.matmul %7, %8, %cst_9 {dimension_numbers = #tpu.dot_dimension_numbers<[1], [0], [0], [1], [0, 0, 1, 1], [], []>} : vector<8x32xbf16>, vector<32x64xbf16>, vector<8x64xf32> -> vector<8x64xf32>
    %c0_10 = arith.constant 0 : index
    %c0_11 = arith.constant 0 : index
    %10 = vector.load %arg5[%c0_10, %c0_11] : memref<1x64xf32, #tpu.memory_space<vmem>>, vector<1x64xf32>
    %11 = vector.broadcast %10 : vector<1x64xf32> to vector<8x64xf32>
    %12 = arith.addf %9, %11 : vector<8x64xf32>
    %cst_12 = arith.constant 0.000000e+00 : f32
    %13 = vector.broadcast %cst_12 : f32 to vector<8x64xf32>
    %14 = arith.maximumf %12, %13 : vector<8x64xf32>
    %15 = arith.truncf %14 : vector<8x64xf32> to vector<8x64xbf16>
    %c0_13 = arith.constant 0 : index
    %c0_14 = arith.constant 0 : index
    %16 = vector.load %arg6[%c0_13, %c0_14] : memref<64x128xbf16, #tpu.memory_space<vmem>>, vector<64x128xbf16>
    %cst_15 = arith.constant dense<0.000000e+00> : vector<8x128xf32>
    %17 = tpu.matmul %15, %16, %cst_15 {dimension_numbers = #tpu.dot_dimension_numbers<[1], [0], [0], [1], [0, 0, 1, 1], [], []>} : vector<8x64xbf16>, vector<64x128xbf16>, vector<8x128xf32> -> vector<8x128xf32>
    %c0_16 = arith.constant 0 : index
    %c0_17 = arith.constant 0 : index
    %18 = vector.load %arg7[%c0_16, %c0_17] : memref<1x128xf32, #tpu.memory_space<vmem>>, vector<1x128xf32>
    %19 = vector.broadcast %18 : vector<1x128xf32> to vector<8x128xf32>
    %20 = arith.addf %17, %19 : vector<8x128xf32>
    %cst_18 = arith.constant dense<0xFF800000> : vector<8xf32>
    %21 = vector.multi_reduction <maximumf>, %20, %cst_18 [1] : vector<8x128xf32> to vector<8xf32>
    %22 = vector.shape_cast %21 : vector<8xf32> to vector<8x1xf32>
    %23 = vector.broadcast %22 : vector<8x1xf32> to vector<8x128xf32>
    %24 = arith.subf %20, %23 : vector<8x128xf32>
    %25 = math.exp %24 : vector<8x128xf32>
    %cst_19 = arith.constant dense<0.000000e+00> : vector<8xf32>
    %26 = vector.multi_reduction <add>, %25, %cst_19 [1] : vector<8x128xf32> to vector<8xf32>
    %27 = vector.shape_cast %26 : vector<8xf32> to vector<8x1xf32>
    %28 = tpu.reciprocal %27 {approx = true} : vector<8x1xf32> -> vector<8x1xf32>
    %29 = vector.broadcast %28 : vector<8x1xf32> to vector<8x128xf32>
    %30 = arith.mulf %25, %29 : vector<8x128xf32>
    %c0_20 = arith.constant 0 : index
    %c0_21 = arith.constant 0 : index
    %31 = vector.load %arg8[%c0_20, %c0_21] : memref<8x128xf32, #tpu.memory_space<vmem>>, vector<8x128xf32>
    tpu.vector_store %arg8[%c0_20, %c0_21], %30 {strides = array<i32>} : memref<8x128xf32, #tpu.memory_space<vmem>>, vector<8x128xf32>,
    return
  }
  func.func @transform_0(%arg0: i32) -> (i32, i32) {
    %c0_i32 = arith.constant 0 : i32
    %c0_i32_0 = arith.constant 0 : i32
    return %arg0, %c0_i32 : i32, i32
  }
  func.func @transform_1(%arg0: i32) -> (i32, i32) {
    %c0_i32 = arith.constant 0 : i32
    %c0_i32_0 = arith.constant 0 : i32
    %c0_i32_1 = arith.constant 0 : i32
    return %c0_i32, %c0_i32_0 : i32, i32
  }
  func.func @transform_2(%arg0: i32) -> (i32, i32) {
    %c0_i32 = arith.constant 0 : i32
    %c0_i32_0 = arith.constant 0 : i32
    %c0_i32_1 = arith.constant 0 : i32
    return %c0_i32, %c0_i32_0 : i32, i32
  }
  func.func @transform_3(%arg0: i32) -> (i32, i32) {
    %c0_i32 = arith.constant 0 : i32
    %c0_i32_0 = arith.constant 0 : i32
    %c0_i32_1 = arith.constant 0 : i32
    return %c0_i32, %c0_i32_0 : i32, i32
  }
  func.func @transform_4(%arg0: i32) -> (i32, i32) {
    %c0_i32 = arith.constant 0 : i32
    %c0_i32_0 = arith.constant 0 : i32
    %c0_i32_1 = arith.constant 0 : i32
    return %c0_i32, %c0_i32_0 : i32, i32
  }
  func.func @transform_5(%arg0: i32) -> (i32, i32) {
    %c0_i32 = arith.constant 0 : i32
    %c0_i32_0 = arith.constant 0 : i32
    %c0_i32_1 = arith.constant 0 : i32
    return %c0_i32, %c0_i32_0 : i32, i32
  }
  func.func @transform_6(%arg0: i32) -> (i32, i32) {
    %c0_i32 = arith.constant 0 : i32
    %c0_i32_0 = arith.constant 0 : i32
    %c0_i32_1 = arith.constant 0 : i32
    return %c0_i32, %c0_i32_0 : i32, i32
  }
  func.func @transform_7(%arg0: i32) -> (i32, i32) {
    %c0_i32 = arith.constant 0 : i32
    %c0_i32_0 = arith.constant 0 : i32
    return %arg0, %c0_i32 : i32, i32
  }
}

</mosaic_0001>

<llo_original>
// kernel: tpu_custom_call.1
$region0: #{tpu_custom_call.1}
  #allocation0 [shape = 'u32[]', space=smem, size = 0x4, offset = 0x4, fixed_abs, tag = 'smem constant byte address 0x4 - core index']
  #allocation1 [shape = 'u32[144,128]{1,0:T(1,128)}', space=vmem, size = 0x12000, scoped, tag = 'internal scratch']
  %s0 = inlined_call_operand.vmem [shape: bf16[336,32], index: 0, kind: input, shape index: {}]
  %s1 = inlined_call_operand.vmem [shape: f32[8,336], index: 1, kind: input, shape index: {}]
  %s2 = inlined_call_operand.vmem [shape: bf16[32,32], index: 2, kind: input, shape index: {}]
  %s3 = inlined_call_operand.vmem [shape: bf16[32,64], index: 3, kind: input, shape index: {}]
  %s4 = inlined_call_operand.vmem [shape: f32[1,64], index: 4, kind: input, shape index: {}]
  %s5 = inlined_call_operand.vmem [shape: bf16[64,128], index: 5, kind: input, shape index: {}]
  %s6 = inlined_call_operand.vmem [shape: f32[1,128], index: 6, kind: input, shape index: {}]
  %s7 = inlined_call_operand.hbm [shape: f32[8,128], index: 7, kind: output, shape index: {}]
  %s8 = sld [smem:[#allocation0]]
  $region38: #{tpu_custom_call.1} parent=0
    _
  %s10 = ssub.s32 1, %s8
  %s11 = scalar_select 0, %s10, %s8
  $region1: #{tpu_custom_call.1} parent=0
    #allocation2 [shape = 'u8[4096]{0}', space=vmem, size = 0x1000, scoped, tag = 'output window, operand 0, single buffered']
    #allocation3 [shape = 's32[1]{0}', space=sflag, size = 0x4, scoped, tag = 'scoped memory for tpu_custom_call.1']
    %12 = vsyncpa [#allocation3], 0
    // Predicated region
    $region2: #{tpu_custom_call.1} parent=1 // pred_check
      _
    $region3: #{tpu_custom_call.1} parent=1 // pred_check_branch
      %14 = sbr.rel (0) target = $region5
    $region4: #{tpu_custom_call.1} parent=1 // pred_region
      _
    $region5: #{tpu_custom_call.1} parent=1 // pred_fallthru
      _
    // Predicated region
    $region6: #{tpu_custom_call.1} parent=1 // pred_check
      _
    $region7: #{tpu_custom_call.1} parent=1 // pred_check_branch
      %16 = sbr.rel (0) target = $region9
    $region8: #{tpu_custom_call.1} parent=1 // pred_region
      _
    $region9: #{tpu_custom_call.1} parent=1 // pred_fallthru
      _
    // Predicated region
    $region10: #{tpu_custom_call.1} parent=1 // pred_check
      _
    $region11: #{tpu_custom_call.1} parent=1 // pred_check_branch
      %18 = sbr.rel (0) target = $region13
    $region12: #{tpu_custom_call.1} parent=1 // pred_region
      _
    $region13: #{tpu_custom_call.1} parent=1 // pred_fallthru
      _
    // Predicated region
    $region14: #{tpu_custom_call.1} parent=1 // pred_check
      _
    $region15: #{tpu_custom_call.1} parent=1 // pred_check_branch
      %20 = sbr.rel (0) target = $region17
    $region16: #{tpu_custom_call.1} parent=1 // pred_region
      _
    $region17: #{tpu_custom_call.1} parent=1 // pred_fallthru
      _
    // Predicated region
    $region18: #{tpu_custom_call.1} parent=1 // pred_check
      _
    $region19: #{tpu_custom_call.1} parent=1 // pred_check_branch
      %22 = sbr.rel (0) target = $region21
    $region20: #{tpu_custom_call.1} parent=1 // pred_region
      _
    $region21: #{tpu_custom_call.1} parent=1 // pred_fallthru
      _
    // Predicated region
    $region22: #{tpu_custom_call.1} parent=1 // pred_check
      _
    $region23: #{tpu_custom_call.1} parent=1 // pred_check_branch
      %24 = sbr.rel (0) target = $region25
    $region24: #{tpu_custom_call.1} parent=1 // pred_region
      _
    $region25: #{tpu_custom_call.1} parent=1 // pred_fallthru
      _
    // Predicated region
    $region26: #{tpu_custom_call.1} parent=1 // pred_check
      _
    $region27: #{tpu_custom_call.1} parent=1 // pred_check_branch
      %26 = sbr.rel (0) target = $region29
    $region28: #{tpu_custom_call.1} parent=1 // pred_region
      _
    $region29: #{tpu_custom_call.1} parent=1 // pred_fallthru
      _
    %v28 = vld [vmem:[%s0] sm:$0xf]
    %v29 = vld [vmem:[%s0 + $0x4] sm:$0xf]
    %v30 = vld [vmem:[%s0 + $0x8] sm:$0xf]
    %v31 = vld [vmem:[%s0 + $0xc] sm:$0xf]
    %v32 = vld [vmem:[%s0 + $0x10] sm:$0xf]
    %v33 = vld [vmem:[%s0 + $0x14] sm:$0xf]
    %v34 = vld [vmem:[%s0 + $0x18] sm:$0xf]
    %v35 = vld [vmem:[%s0 + $0x1c] sm:$0xf]
    %v36 = vld [vmem:[%s0 + $0x20] sm:$0xf]
    %v37 = vld [vmem:[%s0 + $0x24] sm:$0xf]
    %v38 = vld [vmem:[%s0 + $0x28] sm:$0xf]
    %v39 = vld [vmem:[%s0 + $0x2c] sm:$0xf]
    %v40 = vld [vmem:[%s0 + $0x30] sm:$0xf]
    %v41 = vld [vmem:[%s0 + $0x34] sm:$0xf]
    %v42 = vld [vmem:[%s0 + $0x38] sm:$0xf]
    %v43 = vld [vmem:[%s0 + $0x3c] sm:$0xf]
    %v44 = vld [vmem:[%s0 + $0x40] sm:$0xf]
    %v45 = vld [vmem:[%s0 + $0x44] sm:$0xf]
    %v46 = vld [vmem:[%s0 + $0x48] sm:$0xf]
    %v47 = vld [vmem:[%s0 + $0x4c] sm:$0xf]
    %v48 = vld [vmem:[%s0 + $0x50] sm:$0xf]
    %v49 = vld [vmem:[%s0 + $0x54] sm:$0xf]
    %v50 = vld [vmem:[%s0 + $0x58] sm:$0xf]
    %v51 = vld [vmem:[%s0 + $0x5c] sm:$0xf]
    %v52 = vld [vmem:[%s0 + $0x60] sm:$0xf]
    %v53 = vld [vmem:[%s0 + $0x64] sm:$0xf]
    %v54 = vld [vmem:[%s0 + $0x68] sm:$0xf]
    %v55 = vld [vmem:[%s0 + $0x6c] sm:$0xf]
    %v56 = vld [vmem:[%s0 + $0x70] sm:$0xf]
    %v57 = vld [vmem:[%s0 + $0x74] sm:$0xf]
    %v58 = vld [vmem:[%s0 + $0x78] sm:$0xf]
    %v59 = vld [vmem:[%s0 + $0x7c] sm:$0xf]
    %v60 = vld [vmem:[%s0 + $0x80] sm:$0xf]
    %v61 = vld [vmem:[%s0 + $0x84] sm:$0xf]
    %v62 = vld [vmem:[%s0 + $0x88] sm:$0xf]
    %v63 = vld [vmem:[%s0 + $0x8c] sm:$0xf]
    %v64 = vld [vmem:[%s0 + $0x90] sm:$0xf]
    %v65 = vld [vmem:[%s0 + $0x94] sm:$0xf]
    %v66 = vld [vmem:[%s0 + $0x98] sm:$0xf]
    %v67 = vld [vmem:[%s0 + $0x9c] sm:$0xf]
    %v68 = vld [vmem:[%s0 + $0xa0] sm:$0xf]
    %v69 = vld [vmem:[%s0 + $0xa4] sm:$0xf]
    %v70 = vld [vmem:[%s2] sm:$0xf]
    %v71 = vld [vmem:[%s2 + $0x4] sm:$0xf]
    %v72 = vld [vmem:[%s2 + $0x8] sm:$0xf]
    %v73 = vld [vmem:[%s2 + $0xc] sm:$0xf]
    %v116 = vunpack.c.l.b16 %v28
    %v117 = vunpack.c.l.b16 %v29
    %v118 = vunpack.c.l.b16 %v30
    %v119 = vunpack.c.l.b16 %v31
    %v120 = vunpack.c.l.b16 %v32
    %v121 = vunpack.c.l.b16 %v33
    %v122 = vunpack.c.l.b16 %v34
    %v123 = vunpack.c.l.b16 %v35
    %v124 = vunpack.c.l.b16 %v36
    %v125 = vunpack.c.l.b16 %v37
    %v126 = vunpack.c.l.b16 %v38
    %v127 = vunpack.c.l.b16 %v39
    %v128 = vunpack.c.l.b16 %v40
    %v129 = vunpack.c.l.b16 %v41
    %v130 = vunpack.c.l.b16 %v42
    %v131 = vunpack.c.l.b16 %v43
    %v132 = vunpack.c.l.b16 %v44
    %v133 = vunpack.c.l.b16 %v45
    %v134 = vunpack.c.l.b16 %v46
    %v135 = vunpack.c.l.b16 %v47
    %v136 = vunpack.c.l.b16 %v48
    %v137 = vunpack.c.l.b16 %v49
    %v138 = vunpack.c.l.b16 %v50
    %v139 = vunpack.c.l.b16 %v51
    %v140 = vunpack.c.l.b16 %v52
    %v141 = vunpack.c.l.b16 %v53
    %v142 = vunpack.c.l.b16 %v54
    %v143 = vunpack.c.l.b16 %v55
    %v144 = vunpack.c.l.b16 %v56
    %v145 = vunpack.c.l.b16 %v57
    %v146 = vunpack.c.l.b16 %v58
    %v147 = vunpack.c.l.b16 %v59
    %v148 = vunpack.c.l.b16 %v60
    %v149 = vunpack.c.l.b16 %v61
    %v150 = vunpack.c.l.b16 %v62
    %v151 = vunpack.c.l.b16 %v63
    %v152 = vunpack.c.l.b16 %v64
    %v153 = vunpack.c.l.b16 %v65
    %v154 = vunpack.c.l.b16 %v66
    %v155 = vunpack.c.l.b16 %v67
    %v156 = vunpack.c.l.b16 %v68
    %v157 = vunpack.c.l.b16 %v69
    %v158 = vpack.c.b16 %v117, %v116
    %v159 = vpack.c.b16 %v119, %v118
    %v160 = vpack.c.b16 %v121, %v120
    %v161 = vpack.c.b16 %v123, %v122
    %v162 = vpack.c.b16 %v125, %v124
    %v163 = vpack.c.b16 %v127, %v126
    %v164 = vpack.c.b16 %v129, %v128
    %v165 = vpack.c.b16 %v131, %v130
    %v166 = vpack.c.b16 %v133, %v132
    %v167 = vpack.c.b16 %v135, %v134
    %v168 = vpack.c.b16 %v137, %v136
    %v169 = vpack.c.b16 %v139, %v138
    %v170 = vpack.c.b16 %v141, %v140
    %v171 = vpack.c.b16 %v143, %v142
    %v172 = vpack.c.b16 %v145, %v144
    %v173 = vpack.c.b16 %v147, %v146
    %v174 = vpack.c.b16 %v149, %v148
    %v175 = vpack.c.b16 %v151, %v150
    %v176 = vpack.c.b16 %v153, %v152
    %v177 = vpack.c.b16 %v155, %v154
    %v178 = vpack.c.b16 %v157, %v156
    %v183 = vunpack.c.l.b16 %v70
    %v184 = vunpack.c.l.b16 %v71
    %v185 = vunpack.c.l.b16 %v72
    %v186 = vunpack.c.l.b16 %v73
    %v187 = vpack.c.b16 %v184, %v183
    %v188 = vpack.c.b16 %v186, %v185
    %vm191 = vcmask 261120
    %v193 = vsel %vm191, %v158, 0
    %v196 = vsel %vm191, %v159, 0
    %v199 = vsel %vm191, %v160, 0
    %v202 = vsel %vm191, %v161, 0
    %v205 = vsel %vm191, %v162, 0
    %v208 = vsel %vm191, %v163, 0
    %v211 = vsel %vm191, %v164, 0
    %v214 = vsel %vm191, %v165, 0
    %v217 = vsel %vm191, %v166, 0
    %v220 = vsel %vm191, %v167, 0
    %v223 = vsel %vm191, %v168, 0
    %v226 = vsel %vm191, %v169, 0
    %v229 = vsel %vm191, %v170, 0
    %v232 = vsel %vm191, %v171, 0
    %v235 = vsel %vm191, %v172, 0
    %v238 = vsel %vm191, %v173, 0
    %v241 = vsel %vm191, %v174, 0
    %v244 = vsel %vm191, %v175, 0
    %v247 = vsel %vm191, %v176, 0
    %v250 = vsel %vm191, %v177, 0
    %v253 = vsel %vm191, %v178, 0
    %255 = vmatprep.subr.bf16.mxu0 0
    %256 = vmatpush1.bf16.msra.mxu0 %v187
    %257 = vmatprep.subr.bf16.mxu0 0
    %258 = vmatpush1.bf16.msra.mxu0 %v188
    %259 = vmatprep.subr.bf16.mxu0 0
    %260 = vmatpush1.bf16.msra.mxu0 0
    %261 = vmatprep.subr.bf16.mxu0 0
    %262 = vmatpush1.bf16.msra.mxu0 0
    %263 = vmatprep.subr.bf16.mxu0 0
    %264 = vmatpush1.bf16.msra.mxu0 0
    %265 = vmatprep.subr.bf16.mxu0 0
    %266 = vmatpush1.bf16.msra.mxu0 0
    %267 = vmatprep.subr.bf16.mxu0 0
    %268 = vmatpush1.bf16.msra.mxu0 0
    %269 = vmatprep.subr.bf16.mxu0 0
    %270 = vmatpush1.bf16.msra.mxu0 0
    %271 = vmatprep.subr.bf16.mxu0 0
    %272 = vmatpush1.bf16.msra.mxu0 0
    %273 = vmatprep.subr.bf16.mxu0 0
    %274 = vmatpush1.bf16.msra.mxu0 0
    %275 = vmatprep.subr.bf16.mxu0 0
    %276 = vmatpush1.bf16.msra.mxu0 0
    %277 = vmatprep.subr.bf16.mxu0 0
    %278 = vmatpush1.bf16.msra.mxu0 0
    %279 = vmatprep.subr.bf16.mxu0 0
    %280 = vmatpush1.bf16.msra.mxu0 0
    %281 = vmatprep.subr.bf16.mxu0 0
    %282 = vmatpush1.bf16.msra.mxu0 0
    %283 = vmatprep.subr.bf16.mxu0 0
    %284 = vmatpush1.bf16.msra.mxu0 0
    %285 = vmatprep.subr.bf16.mxu0 0
    %286 = vmatpush1.bf16.msra.mxu0 0
    %287 = vmatprep.mubr.bf16.mxu0 0
    %288 = vmatmul.mubr.bf16.gmra.mrb[0].mxu0 %v193
    %v289 = vpop.f32.mrb[0].mxu0
    %v290 = vadd.f32 0.0, %v289
    %v291 = vpop.f32.mrb[0].mxu0
    %v292 = vpop.f32.mrb[0].mxu0
    %v293 = vadd.f32 0.0, %v292
    %v294 = vpop.f32.mrb[0].mxu0
    %295 = vmatprep.mubr.bf16.mxu0 0
    %296 = vmatmul.mubr.bf16.gmra.mrb[0].mxu0 %v196
    %v297 = vpop.f32.mrb[0].mxu0
    %v298 = vadd.f32 0.0, %v297
    %v299 = vpop.f32.mrb[0].mxu0
    %v300 = vpop.f32.mrb[0].mxu0
    %v301 = vadd.f32 0.0, %v300
    %v302 = vpop.f32.mrb[0].mxu0
    %303 = vmatprep.mubr.bf16.mxu0 0
    %304 = vmatmul.mubr.bf16.gmra.mrb[0].mxu0 %v199
    %v305 = vpop.f32.mrb[0].mxu0
    %v306 = vadd.f32 0.0, %v305
    %v307 = vpop.f32.mrb[0].mxu0
    %v308 = vpop.f32.mrb[0].mxu0
    %v309 = vadd.f32 0.0, %v308
    %v310 = vpop.f32.mrb[0].mxu0
    %311 = vmatprep.mubr.bf16.mxu0 0
    %312 = vmatmul.mubr.bf16.gmra.mrb[0].mxu0 %v202
    %v313 = vpop.f32.mrb[0].mxu0
    %v314 = vadd.f32 0.0, %v313
    %v315 = vpop.f32.mrb[0].mxu0
    %v316 = vpop.f32.mrb[0].mxu0
    %v317 = vadd.f32 0.0, %v316
    %v318 = vpop.f32.mrb[0].mxu0
    %319 = vmatprep.mubr.bf16.mxu0 0
    %320 = vmatmul.mubr.bf16.gmra.mrb[0].mxu0 %v205
    %v321 = vpop.f32.mrb[0].mxu0
    %v322 = vadd.f32 0.0, %v321
    %v323 = vpop.f32.mrb[0].mxu0
    %v324 = vpop.f32.mrb[0].mxu0
    %v325 = vadd.f32 0.0, %v324
    %v326 = vpop.f32.mrb[0].mxu0
    %327 = vmatprep.mubr.bf16.mxu0 0
    %328 = vmatmul.mubr.bf16.gmra.mrb[0].mxu0 %v208
    %v329 = vpop.f32.mrb[0].mxu0
    %v330 = vadd.f32 0.0, %v329
    %v331 = vpop.f32.mrb[0].mxu0
    %v332 = vpop.f32.mrb[0].mxu0
    %v333 = vadd.f32 0.0, %v332
    %v334 = vpop.f32.mrb[0].mxu0
    %335 = vmatprep.mubr.bf16.mxu0 0
    %336 = vmatmul.mubr.bf16.gmra.mrb[0].mxu0 %v211
    %v337 = vpop.f32.mrb[0].mxu0
    %v338 = vadd.f32 0.0, %v337
    %v339 = vpop.f32.mrb[0].mxu0
    %v340 = vpop.f32.mrb[0].mxu0
    %v341 = vadd.f32 0.0, %v340
    %v342 = vpop.f32.mrb[0].mxu0
    %343 = vmatprep.mubr.bf16.mxu0 0
    %344 = vmatmul.mubr.bf16.gmra.mrb[0].mxu0 %v214
    %v345 = vpop.f32.mrb[0].mxu0
    %v346 = vadd.f32 0.0, %v345
    %v347 = vpop.f32.mrb[0].mxu0
    %v348 = vpop.f32.mrb[0].mxu0
    %v349 = vadd.f32 0.0, %v348
    %v350 = vpop.f32.mrb[0].mxu0
    %351 = vmatprep.mubr.bf16.mxu0 0
    %352 = vmatmul.mubr.bf16.gmra.mrb[0].mxu0 %v217
    %v353 = vpop.f32.mrb[0].mxu0
    %v354 = vadd.f32 0.0, %v353
    %v355 = vpop.f32.mrb[0].mxu0
    %v356 = vpop.f32.mrb[0].mxu0
    %v357 = vadd.f32 0.0, %v356
    %v358 = vpop.f32.mrb[0].mxu0
    %359 = vmatprep.mubr.bf16.mxu0 0
    %360 = vmatmul.mubr.bf16.gmra.mrb[0].mxu0 %v220
    %v361 = vpop.f32.mrb[0].mxu0
    %v362 = vadd.f32 0.0, %v361
    %v363 = vpop.f32.mrb[0].mxu0
    %v364 = vpop.f32.mrb[0].mxu0
    %v365 = vadd.f32 0.0, %v364
    %v366 = vpop.f32.mrb[0].mxu0
    %367 = vmatprep.mubr.bf16.mxu0 0
    %368 = vmatmul.mubr.bf16.gmra.mrb[0].mxu0 %v223
    %v369 = vpop.f32.mrb[0].mxu0
    %v370 = vadd.f32 0.0, %v369
    %v371 = vpop.f32.mrb[0].mxu0
    %v372 = vpop.f32.mrb[0].mxu0
    %v373 = vadd.f32 0.0, %v372
    %v374 = vpop.f32.mrb[0].mxu0
    %375 = vmatprep.mubr.bf16.mxu0 0
    %376 = vmatmul.mubr.bf16.gmra.mrb[0].mxu0 %v226
    %v377 = vpop.f32.mrb[0].mxu0
    %v378 = vadd.f32 0.0, %v377
    %v379 = vpop.f32.mrb[0].mxu0
    %v380 = vpop.f32.mrb[0].mxu0
    %v381 = vadd.f32 0.0, %v380
    %v382 = vpop.f32.mrb[0].mxu0
    %383 = vmatprep.mubr.bf16.mxu0 0
    %384 = vmatmul.mubr.bf16.gmra.mrb[0].mxu0 %v229
    %v385 = vpop.f32.mrb[0].mxu0
    %v386 = vadd.f32 0.0, %v385
    %v387 = vpop.f32.mrb[0].mxu0
    %v388 = vpop.f32.mrb[0].mxu0
    %v389 = vadd.f32 0.0, %v388
    %v390 = vpop.f32.mrb[0].mxu0
    %391 = vmatprep.mubr.bf16.mxu0 0
    %392 = vmatmul.mubr.bf16.gmra.mrb[0].mxu0 %v232
    %v393 = vpop.f32.mrb[0].mxu0
    %v394 = vadd.f32 0.0, %v393
    %v395 = vpop.f32.mrb[0].mxu0
    %v396 = vpop.f32.mrb[0].mxu0
    %v397 = vadd.f32 0.0, %v396
    %v398 = vpop.f32.mrb[0].mxu0
    %399 = vmatprep.mubr.bf16.mxu0 0
    %400 = vmatmul.mubr.bf16.gmra.mrb[0].mxu0 %v235
    %v401 = vpop.f32.mrb[0].mxu0
    %v402 = vadd.f32 0.0, %v401
    %v403 = vpop.f32.mrb[0].mxu0
    %v404 = vpop.f32.mrb[0].mxu0
    %v405 = vadd.f32 0.0, %v404
    %v406 = vpop.f32.mrb[0].mxu0
    %407 = vmatprep.mubr.bf16.mxu0 0
    %408 = vmatmul.mubr.bf16.gmra.mrb[0].mxu0 %v238
    %v409 = vpop.f32.mrb[0].mxu0
    %v410 = vadd.f32 0.0, %v409
    %v411 = vpop.f32.mrb[0].mxu0
    %v412 = vpop.f32.mrb[0].mxu0
    %v413 = vadd.f32 0.0, %v412
    %v414 = vpop.f32.mrb[0].mxu0
    %415 = vmatprep.mubr.bf16.mxu0 0
    %416 = vmatmul.mubr.bf16.gmra.mrb[0].mxu0 %v241
    %v417 = vpop.f32.mrb[0].mxu0
    %v418 = vadd.f32 0.0, %v417
    %v419 = vpop.f32.mrb[0].mxu0
    %v420 = vpop.f32.mrb[0].mxu0
    %v421 = vadd.f32 0.0, %v420
    %v422 = vpop.f32.mrb[0].mxu0
    %423 = vmatprep.mubr.bf16.mxu0 0
    %424 = vmatmul.mubr.bf16.gmra.mrb[0].mxu0 %v244
    %v425 = vpop.f32.mrb[0].mxu0
    %v426 = vadd.f32 0.0, %v425
    %v427 = vpop.f32.mrb[0].mxu0
    %v428 = vpop.f32.mrb[0].mxu0
    %v429 = vadd.f32 0.0, %v428
    %v430 = vpop.f32.mrb[0].mxu0
    %431 = vmatprep.mubr.bf16.mxu0 0
    %432 = vmatmul.mubr.bf16.gmra.mrb[0].mxu0 %v247
    %v433 = vpop.f32.mrb[0].mxu0
    %v434 = vadd.f32 0.0, %v433
    %v435 = vpop.f32.mrb[0].mxu0
    %v436 = vpop.f32.mrb[0].mxu0
    %v437 = vadd.f32 0.0, %v436
    %v438 = vpop.f32.mrb[0].mxu0
    %439 = vmatprep.mubr.bf16.mxu0 0
    %440 = vmatmul.mubr.bf16.gmra.mrb[0].mxu0 %v250
    %v441 = vpop.f32.mrb[0].mxu0
    %v442 = vadd.f32 0.0, %v441
    %v443 = vpop.f32.mrb[0].mxu0
    %v444 = vpop.f32.mrb[0].mxu0
    %v445 = vadd.f32 0.0, %v444
    %v446 = vpop.f32.mrb[0].mxu0
    %447 = vmatprep.mubr.bf16.mxu0 0
    %448 = vmatmul.mubr.bf16.gmra.mrb[0].mxu0 %v253
    %v449 = vpop.f32.mrb[0].mxu0
    %v450 = vadd.f32 0.0, %v449
    %v451 = vpop.f32.mrb[0].mxu0
    %v452 = vpop.f32.mrb[0].mxu0
    %v453 = vadd.f32 0.0, %v452
    %v454 = vpop.f32.mrb[0].mxu0
    %455 = vdwg.mxu0
    %v456 = vmax.f32 %v290, 0.0
    %v457 = vmax.f32 %v293, 0.0
    %v458 = vmax.f32 %v298, 0.0
    %v459 = vmax.f32 %v301, 0.0
    %v460 = vmax.f32 %v306, 0.0
    %v461 = vmax.f32 %v309, 0.0
    %v462 = vmax.f32 %v314, 0.0
    %v463 = vmax.f32 %v317, 0.0
    %v464 = vmax.f32 %v322, 0.0
    %v465 = vmax.f32 %v325, 0.0
    %v466 = vmax.f32 %v330, 0.0
    %v467 = vmax.f32 %v333, 0.0
    %v468 = vmax.f32 %v338, 0.0
    %v469 = vmax.f32 %v341, 0.0
    %v470 = vmax.f32 %v346, 0.0
    %v471 = vmax.f32 %v349, 0.0
    %v472 = vmax.f32 %v354, 0.0
    %v473 = vmax.f32 %v357, 0.0
    %v474 = vmax.f32 %v362, 0.0
    %v475 = vmax.f32 %v365, 0.0
    %v476 = vmax.f32 %v370, 0.0
    %v477 = vmax.f32 %v373, 0.0
    %v478 = vmax.f32 %v378, 0.0
    %v479 = vmax.f32 %v381, 0.0
    %v480 = vmax.f32 %v386, 0.0
    %v481 = vmax.f32 %v389, 0.0
    %v482 = vmax.f32 %v394, 0.0
    %v483 = vmax.f32 %v397, 0.0
    %v484 = vmax.f32 %v402, 0.0
    %v485 = vmax.f32 %v405, 0.0
    %v486 = vmax.f32 %v410, 0.0
    %v487 = vmax.f32 %v413, 0.0
    %v488 = vmax.f32 %v418, 0.0
    %v489 = vmax.f32 %v421, 0.0
    %v490 = vmax.f32 %v426, 0.0
    %v491 = vmax.f32 %v429, 0.0
    %v492 = vmax.f32 %v434, 0.0
    %v493 = vmax.f32 %v437, 0.0
    %v494 = vmax.f32 %v442, 0.0
    %v495 = vmax.f32 %v445, 0.0
    %v496 = vmax.f32 %v450, 0.0
    %v497 = vmax.f32 %v453, 0.0
    %v498 = vld [vmem:[%s1] sm:$0xff]
    %v499 = vld [vmem:[%s1 + $0x8] sm:$0xff]
    %v500 = vld [vmem:[%s1 + $0x10] sm:$0xff]
    %vm501 = vcmask 654336
    %v503 = vsel %vm501, %v500, 0
    %505 = vmatprep.subr.mxu0 0.0
    %506 = vmatpush1.msra.mxu0 %v456
    %507 = vmatprep.subr.mxu0 0.0
    %508 = vmatpush1.msra.mxu0 %v457
    %509 = vmatprep.subr.mxu0 0.0
    %510 = vmatpush1.msra.mxu0 %v458
    %511 = vmatprep.subr.mxu0 0.0
    %512 = vmatpush1.msra.mxu0 %v459
    %513 = vmatprep.subr.mxu0 0.0
    %514 = vmatpush1.msra.mxu0 %v460
    %515 = vmatprep.subr.mxu0 0.0
    %516 = vmatpush1.msra.mxu0 %v461
    %517 = vmatprep.subr.mxu0 0.0
    %518 = vmatpush1.msra.mxu0 %v462
    %519 = vmatprep.subr.mxu0 0.0
    %520 = vmatpush1.msra.mxu0 %v463
    %521 = vmatprep.subr.mxu0 0.0
    %522 = vmatpush1.msra.mxu0 %v464
    %523 = vmatprep.subr.mxu0 0.0
    %524 = vmatpush1.msra.mxu0 %v465
    %525 = vmatprep.subr.mxu0 0.0
    %526 = vmatpush1.msra.mxu0 %v466
    %527 = vmatprep.subr.mxu0 0.0
    %528 = vmatpush1.msra.mxu0 %v467
    %529 = vmatprep.subr.mxu0 0.0
    %530 = vmatpush1.msra.mxu0 %v468
    %531 = vmatprep.subr.mxu0 0.0
    %532 = vmatpush1.msra.mxu0 %v469
    %533 = vmatprep.subr.mxu0 0.0
    %534 = vmatpush1.msra.mxu0 %v470
    %535 = vmatprep.subr.mxu0 0.0
    %536 = vmatpush1.msra.mxu0 %v471
    %537 = vmatprep.subr.mxu0 0.0
    %538 = vmatpush1.msra.mxu0 %v472
    %539 = vmatprep.subr.mxu0 0.0
    %540 = vmatpush1.msra.mxu0 %v473
    %541 = vmatprep.subr.mxu0 0.0
    %542 = vmatpush1.msra.mxu0 %v474
    %543 = vmatprep.subr.mxu0 0.0
    %544 = vmatpush1.msra.mxu0 %v475
    %545 = vmatprep.subr.mxu0 0.0
    %546 = vmatpush1.msra.mxu0 %v476
    %547 = vmatprep.subr.mxu0 0.0
    %548 = vmatpush1.msra.mxu0 %v477
    %549 = vmatprep.subr.mxu0 0.0
    %550 = vmatpush1.msra.mxu0 %v478
    %551 = vmatprep.subr.mxu0 0.0
    %552 = vmatpush1.msra.mxu0 %v479
    %553 = vmatprep.subr.mxu0 0.0
    %554 = vmatpush1.msra.mxu0 %v480
    %555 = vmatprep.subr.mxu0 0.0
    %556 = vmatpush1.msra.mxu0 %v481
    %557 = vmatprep.subr.mxu0 0.0
    %558 = vmatpush1.msra.mxu0 %v482
    %559 = vmatprep.subr.mxu0 0.0
    %560 = vmatpush1.msra.mxu0 %v483
    %561 = vmatprep.subr.mxu0 0.0
    %562 = vmatpush1.msra.mxu0 %v484
    %563 = vmatprep.subr.mxu0 0.0
    %564 = vmatpush1.msra.mxu0 %v485
    %565 = vmatprep.subr.mxu0 0.0
    %566 = vmatpush1.msra.mxu0 %v486
    %567 = vmatprep.subr.mxu0 0.0
    %568 = vmatpush1.msra.mxu0 %v487
    %569 = vmatprep.mubr.f32.mxu0 %v499
    %570 = vmatmul.mubr.f32.gmra.mrb[0].mxu0 %v498
    %v571 = vpop.f32.mrb[0].mxu0
    %v572 = vadd.f32 0.0, %v571
    %v573 = vpop.f32.mrb[0].mxu0
    %574 = vdwg.mxu0
    %575 = vmatprep.subr.mxu0 0.0
    %576 = vmatpush1.msra.mxu0 %v488
    %577 = vmatprep.subr.mxu0 0.0
    %578 = vmatpush1.msra.mxu0 %v489
    %579 = vmatprep.subr.mxu0 0.0
    %580 = vmatpush1.msra.mxu0 %v490
    %581 = vmatprep.subr.mxu0 0.0
    %582 = vmatpush1.msra.mxu0 %v491
    %583 = vmatprep.subr.mxu0 0.0
    %584 = vmatpush1.msra.mxu0 %v492
    %585 = vmatprep.subr.mxu0 0.0
    %586 = vmatpush1.msra.mxu0 %v493
    %587 = vmatprep.subr.mxu0 0.0
    %588 = vmatpush1.msra.mxu0 %v494
    %589 = vmatprep.subr.mxu0 0.0
    %590 = vmatpush1.msra.mxu0 %v495
    %591 = vmatprep.subr.mxu0 0.0
    %592 = vmatpush1.msra.mxu0 %v496
    %593 = vmatprep.subr.mxu0 0.0
    %594 = vmatpush1.msra.mxu0 %v497
    %595 = vmatprep.subr.mxu0 0.0
    %596 = vmatpush1.msra.mxu0 0.0
    %597 = vmatprep.subr.mxu0 0.0
    %598 = vmatpush1.msra.mxu0 0.0
    %599 = vmatprep.subr.mxu0 0.0
    %600 = vmatpush1.msra.mxu0 0.0
    %601 = vmatprep.subr.mxu0 0.0
    %602 = vmatpush1.msra.mxu0 0.0
    %603 = vmatprep.subr.mxu0 0.0
    %604 = vmatpush1.msra.mxu0 0.0
    %605 = vmatprep.subr.mxu0 0.0
    %606 = vmatpush1.msra.mxu0 0.0
    %607 = vmatprep.subr.mxu0 0.0
    %608 = vmatpush1.msra.mxu0 0.0
    %609 = vmatprep.subr.mxu0 0.0
    %610 = vmatpush1.msra.mxu0 0.0
    %611 = vmatprep.subr.mxu0 0.0
    %612 = vmatpush1.msra.mxu0 0.0
    %613 = vmatprep.subr.mxu0 0.0
    %614 = vmatpush1.msra.mxu0 0.0
    %615 = vmatprep.subr.mxu0 0.0
    %616 = vmatpush1.msra.mxu0 0.0
    %617 = vmatprep.subr.mxu0 0.0
    %618 = vmatpush1.msra.mxu0 0.0
    %619 = vmatprep.subr.mxu0 0.0
    %620 = vmatpush1.msra.mxu0 0.0
    %621 = vmatprep.subr.mxu0 0.0
    %622 = vmatpush1.msra.mxu0 0.0
    %623 = vmatprep.subr.mxu0 0.0
    %624 = vmatpush1.msra.mxu0 0.0
    %625 = vmatprep.subr.mxu0 0.0
    %626 = vmatpush1.msra.mxu0 0.0
    %627 = vmatprep.subr.mxu0 0.0
    %628 = vmatpush1.msra.mxu0 0.0
    %629 = vmatprep.subr.mxu0 0.0
    %630 = vmatpush1.msra.mxu0 0.0
    %631 = vmatprep.subr.mxu0 0.0
    %632 = vmatpush1.msra.mxu0 0.0
    %633 = vmatprep.subr.mxu0 0.0
    %634 = vmatpush1.msra.mxu0 0.0
    %635 = vmatprep.subr.mxu0 0.0
    %636 = vmatpush1.msra.mxu0 0.0
    %637 = vmatprep.subr.mxu0 0.0
    %638 = vmatpush1.msra.mxu0 0.0
    %639 = vmatprep.mubr.f32.mxu0 0.0
    %640 = vmatmul.mubr.f32.gmra.mrb[0].mxu0 %v503
    %v641 = vpop.f32.mrb[0].mxu0
    %v642 = vadd.f32 %v572, %v641
    %v643 = vpop.f32.mrb[0].mxu0
    %644 = vdwg.mxu0
    %v645 = vpack.c.bf16 %v642, %v642
    %v646 = vld [vmem:[%s3] sm:$0xf]
    %v647 = vld [vmem:[%s3 + $0x4] sm:$0xf]
    %v648 = vld [vmem:[%s3 + $0x8] sm:$0xf]
    %v649 = vld [vmem:[%s3 + $0xc] sm:$0xf]
    %v650 = vld [vmem:[%s4] sm:$0x1]
    %v652 = vlaneseq
    %v653 = vshrl.u32 %v652, 7
    %v654 = vsub.s32 0, %v653
    %v655 = vrot.slane %v650, %v654
    %v661 = vunpack.c.l.b16 %v646
    %v662 = vunpack.c.l.b16 %v647
    %v663 = vunpack.c.l.b16 %v648
    %v664 = vunpack.c.l.b16 %v649
    %v665 = vpack.c.b16 %v662, %v661
    %v666 = vpack.c.b16 %v664, %v663
    %v670 = vsel %vm191, %v645, 0
    %672 = vmatprep.subr.bf16.mxu0 0
    %673 = vmatpush1.bf16.msra.mxu0 %v665
    %674 = vmatprep.subr.bf16.mxu0 0
    %675 = vmatpush1.bf16.msra.mxu0 %v666
    %676 = vmatprep.subr.bf16.mxu0 0
    %677 = vmatpush1.bf16.msra.mxu0 0
    %678 = vmatprep.subr.bf16.mxu0 0
    %679 = vmatpush1.bf16.msra.mxu0 0
    %680 = vmatprep.subr.bf16.mxu0 0
    %681 = vmatpush1.bf16.msra.mxu0 0
    %682 = vmatprep.subr.bf16.mxu0 0
    %683 = vmatpush1.bf16.msra.mxu0 0
    %684 = vmatprep.subr.bf16.mxu0 0
    %685 = vmatpush1.bf16.msra.mxu0 0
    %686 = vmatprep.subr.bf16.mxu0 0
    %687 = vmatpush1.bf16.msra.mxu0 0
    %688 = vmatprep.subr.bf16.mxu0 0
    %689 = vmatpush1.bf16.msra.mxu0 0
    %690 = vmatprep.subr.bf16.mxu0 0
    %691 = vmatpush1.bf16.msra.mxu0 0
    %692 = vmatprep.subr.bf16.mxu0 0
    %693 = vmatpush1.bf16.msra.mxu0 0
    %694 = vmatprep.subr.bf16.mxu0 0
    %695 = vmatpush1.bf16.msra.mxu0 0
    %696 = vmatprep.subr.bf16.mxu0 0
    %697 = vmatpush1.bf16.msra.mxu0 0
    %698 = vmatprep.subr.bf16.mxu0 0
    %699 = vmatpush1.bf16.msra.mxu0 0
    %700 = vmatprep.subr.bf16.mxu0 0
    %701 = vmatpush1.bf16.msra.mxu0 0
    %702 = vmatprep.subr.bf16.mxu0 0
    %703 = vmatpush1.bf16.msra.mxu0 0
    %704 = vmatprep.mubr.bf16.mxu0 0
    %705 = vmatmul.mubr.bf16.gmra.mrb[0].mxu0 %v670
    %v706 = vpop.f32.mrb[0].mxu0
    %v707 = vadd.f32 %v655, %v706
    %v708 = vpop.f32.mrb[0].mxu0
    %v709 = vpop.f32.mrb[0].mxu0
    %v710 = vpop.f32.mrb[0].mxu0
    %711 = vdwg.mxu0
    %v712 = vmax.f32 %v707, 0.0
    %v713 = vpack.c.bf16 %v712, %v712
    %v714 = vld [vmem:[%s5] sm:$0xf]
    %v715 = vld [vmem:[%s5 + $0x4] sm:$0xf]
    %v716 = vld [vmem:[%s5 + $0x8] sm:$0xf]
    %v717 = vld [vmem:[%s5 + $0xc] sm:$0xf]
    %v718 = vld [vmem:[%s5 + $0x10] sm:$0xf]
    %v719 = vld [vmem:[%s5 + $0x14] sm:$0xf]
    %v720 = vld [vmem:[%s5 + $0x18] sm:$0xf]
    %v721 = vld [vmem:[%s5 + $0x1c] sm:$0xf]
    %v722 = vld [vmem:[%s6] sm:$0x1]
    %v724 = vlaneseq
    %v725 = vshrl.u32 %v724, 7
    %v726 = vsub.s32 0, %v725
    %v727 = vrot.slane %v722, %v726
    %v737 = vunpack.c.l.b16 %v714
    %v738 = vunpack.c.l.b16 %v715
    %v739 = vunpack.c.l.b16 %v716
    %v740 = vunpack.c.l.b16 %v717
    %v741 = vunpack.c.l.b16 %v718
    %v742 = vunpack.c.l.b16 %v719
    %v743 = vunpack.c.l.b16 %v720
    %v744 = vunpack.c.l.b16 %v721
    %v745 = vpack.c.b16 %v738, %v737
    %v746 = vpack.c.b16 %v740, %v739
    %v747 = vpack.c.b16 %v742, %v741
    %v748 = vpack.c.b16 %v744, %v743
    %vm753 = vcmask 523264
    %v755 = vsel %vm753, %v713, 0
    %757 = vmatprep.subr.bf16.mxu0 0
    %758 = vmatpush1.bf16.msra.mxu0 %v745
    %759 = vmatprep.subr.bf16.mxu0 0
    %760 = vmatpush1.bf16.msra.mxu0 %v746
    %761 = vmatprep.subr.bf16.mxu0 0
    %762 = vmatpush1.bf16.msra.mxu0 %v747
    %763 = vmatprep.subr.bf16.mxu0 0
    %764 = vmatpush1.bf16.msra.mxu0 %v748
    %765 = vmatprep.subr.bf16.mxu0 0
    %766 = vmatpush1.bf16.msra.mxu0 0
    %767 = vmatprep.subr.bf16.mxu0 0
    %768 = vmatpush1.bf16.msra.mxu0 0
    %769 = vmatprep.subr.bf16.mxu0 0
    %770 = vmatpush1.bf16.msra.mxu0 0
    %771 = vmatprep.subr.bf16.mxu0 0
    %772 = vmatpush1.bf16.msra.mxu0 0
    %773 = vmatprep.subr.bf16.mxu0 0
    %774 = vmatpush1.bf16.msra.mxu0 0
    %775 = vmatprep.subr.bf16.mxu0 0
    %776 = vmatpush1.bf16.msra.mxu0 0
    %777 = vmatprep.subr.bf16.mxu0 0
    %778 = vmatpush1.bf16.msra.mxu0 0
    %779 = vmatprep.subr.bf16.mxu0 0
    %780 = vmatpush1.bf16.msra.mxu0 0
    %781 = vmatprep.subr.bf16.mxu0 0
    %782 = vmatpush1.bf16.msra.mxu0 0
    %783 = vmatprep.subr.bf16.mxu0 0
    %784 = vmatpush1.bf16.msra.mxu0 0
    %785 = vmatprep.subr.bf16.mxu0 0
    %786 = vmatpush1.bf16.msra.mxu0 0
    %787 = vmatprep.subr.bf16.mxu0 0
    %788 = vmatpush1.bf16.msra.mxu0 0
    %789 = vmatprep.mubr.bf16.mxu0 0
    %790 = vmatmul.mubr.bf16.gmra.mrb[0].mxu0 %v755
    %v791 = vpop.f32.mrb[0].mxu0
    %v792 = vadd.f32 %v727, %v791
    %v793 = vpop.f32.mrb[0].mxu0
    %v794 = vpop.f32.mrb[0].mxu0
    %v795 = vpop.f32.mrb[0].mxu0
    %796 = vdwg.mxu0
    %797 = vmax.xlane.f32.xlu0 %v792
    %v798 = vpop.xlane.xlu0 %797
    %v799 = vsub.f32 %v792, %v798
    %v800 = vmul.f32 %v799, 1.442695
    %v801 = vpow.pop %v800
    %802 = vadd.xlane.f32.xlu0 %v801
    %v803 = vpop.xlane.xlu0 %802
    %v804 = vrcp.pop %v803
    %v805 = vmul.f32 %v801, %v804
    %806 = vst [vmem:[#allocation2] sm:$0xff] %v805
    // Predicated region
    $region30: #{tpu_custom_call.1} parent=1 // pred_check
      _
    $region31: #{tpu_custom_call.1} parent=1 // pred_check_branch
      %808 = sbr.rel (0) target = $region33
    $region32: #{tpu_custom_call.1} parent=1 // pred_region
      %s810 = ssub.s32 128, 128
      %811 = vsyncadd [#allocation3], %s810
      %s813 = sshll.u32 [#allocation2], 4
      %s814 = int_to_ptr.vmem [resolvable:$true] %s813
      %816 = dma.vmem_to_hbm [thread:$0]  %s814, 128, %s7, [#allocation3]
    $region33: #{tpu_custom_call.1} parent=1 // pred_fallthru
      _
    // Predicated region
    $region34: #{tpu_custom_call.1} parent=1 // pred_check
      _
    $region35: #{tpu_custom_call.1} parent=1 // pred_check_branch
      %818 = sbr.rel (0) target = $region37
    $region36: #{tpu_custom_call.1} parent=1 // pred_region
      %819 = dma.done [#allocation3], 128
    $region37: #{tpu_custom_call.1} parent=1 // pred_fallthru
      _
    %820 = vsyncpa [#allocation3], 1

</llo_original>
